<compile_context>
chip_gen: v7x
topology: tpu7x:2x2x1
jax: 0.10.0
libtpu: 0.0.40
codegen_flags: <defaults>
</compile_context>

<pallas_src>
import jax
import jax.numpy as jnp
from jax import lax
from jax.experimental import pallas as pl
from jax.experimental.pallas import tpu as pltpu


def _band_weights(wt_hwio, W):
    """(3,3,Cin,Cout) HWIO weights -> (3, W*Cin, W*Cout) per-row-shift band matrices.

    For row shift kh (input row h+kh-1), entry [kh, wp*Cin+ci, w*Cout+co] equals
    wt[kh, wp-w+1, ci, co] when 0 <= wp-w+1 < 3 else 0 -- the zero padding along
    W is encoded as structural zeros of the band.
    """
    KH, KW, Cin, Cout = wt_hwio.shape
    wp = jnp.arange(W)[:, None]                     # input column
    w = jnp.arange(W)[None, :]                      # output column
    kw = wp - w + 1                                 # (W, W)
    valid = (kw >= 0) & (kw < KW)
    kw_c = jnp.clip(kw, 0, KW - 1)
    g = wt_hwio[:, kw_c]                            # (KH, W, W, Cin, Cout)
    g = jnp.where(valid[None, :, :, None, None], g, 0.0)
    g = jnp.transpose(g, (0, 1, 3, 2, 4))           # (KH, W, Cin, W, Cout)
    return g.reshape(KH, W * Cin, W * Cout)


def _pick_batch_block(N, H, mxu_rows=256):
    """Pick images-per-grid-step Nb: largest divisor of N with Nb*H close to the
    MXU height (aim >= 256 rows), then shrink if needed so the grid has >= 2
    steps (keeps both v7x TensorCores busy; neutral on v5e/v6e)."""
    target = max(1, -(-mxu_rows // H))              # ceil(mxu_rows / H)
    divisors = [d for d in range(1, N + 1) if N % d == 0]
    nb = max([d for d in divisors if d <= target], default=1)
    if N // nb < 2:
        smaller = [d for d in divisors if N // d >= 2]
        if smaller:
            nb = max(smaller)
    return nb


def _const_block_spec(shape):
    """Constant-index block (weights/bias): DMA'd once, so request single
    buffering when the installed Pallas supports pipeline_mode (halves the
    weight VMEM footprint; no perf downside)."""
    idx = lambda n: (0,) * len(shape)
    try:
        return pl.BlockSpec(shape, idx, pipeline_mode=pl.Buffered(1))
    except (TypeError, AttributeError):
        return pl.BlockSpec(shape, idx)


def residual_block_kernel(x_ref, w1_ref, b1_ref, w2_ref, b2_ref, out_ref):
    """Nb images per grid step.  x_ref/out_ref: (Nb, H, W*C) lane-dense blocks.
    w*_ref: (3, WC, WC) band weights (BN scale folded in), b*_ref: (1, WC) bias."""
    Nb, H, WC = x_ref.shape
    M = Nb * H
    cdt = w1_ref.dtype                               # MXU operand dtype (bf16 default)

    def conv_bn(v, w_ref, bias_ref):
        # 3x3 conv + folded BN scale as 3 MXU matmuls (one per row shift kh).
        # Zero rows at the per-image H borders supply the 'same' padding in H;
        # the band structure of the weight supplies the padding in W.
        zero = jnp.zeros((Nb, 1, WC), v.dtype)
        up = jnp.concatenate([zero, v[:, :-1, :]], axis=1)     # x[h-1]
        dn = jnp.concatenate([v[:, 1:, :], zero], axis=1)      # x[h+1]
        acc = jnp.dot(up.reshape(M, WC).astype(cdt), w_ref[0],
                      preferred_element_type=jnp.float32)
        acc += jnp.dot(v.reshape(M, WC).astype(cdt), w_ref[1],
                       preferred_element_type=jnp.float32)
        acc += jnp.dot(dn.reshape(M, WC).astype(cdt), w_ref[2],
                       preferred_element_type=jnp.float32)
        return (acc + bias_ref[...]).reshape(Nb, H, WC)        # BN bias, f32 epilogue

    x = x_ref[...].astype(jnp.float32)
    h = jnp.maximum(conv_bn(x, w1_ref, b1_ref), 0.0)           # conv1 -> BN1 -> ReLU
    o = conv_bn(h, w2_ref, b2_ref) + x                         # conv2 -> BN2 -> +identity
    out_ref[...] = jnp.maximum(o, 0.0).astype(out_ref.dtype)   # final ReLU


def residual_block_nhwc(x_nhwc, w1_oihw, bn1, w2_oihw, bn2, eps=1e-5,
                        compute_dtype=jnp.bfloat16):
    """NHWC fast path (no layout transposes).  compute_dtype is the MXU operand
    dtype (bf16 default -> native MXU rate on v5e/v6e/v7x with f32 accumulation);
    pass jnp.float32 for bit-exact f32 math."""
    N, H, W, C = x_nhwc.shape
    wt1 = jnp.transpose(w1_oihw, (2, 3, 1, 0)).astype(jnp.float32)   # OIHW -> HWIO
    wt2 = jnp.transpose(w2_oihw, (2, 3, 1, 0)).astype(jnp.float32)
    Cout = wt1.shape[-1]
    assert C == Cout and wt2.shape[-1] == Cout, "identity shortcut needs Cin == Cout"

    WC = W * C
    assert WC % 128 == 0, (
        f"lane-dense layout needs W*C to be a multiple of 128 (lane width); got {WC}")

    g1, be1, m1, v1 = bn1
    g2, be2, m2, v2 = bn2
    s1 = g1 / jnp.sqrt(v1 + eps)
    s2 = g2 / jnp.sqrt(v2 + eps)

    # BN scales folded into the conv weights; only per-channel biases remain.
    # TODO(synk): for real ResNet W/C the (3, W*C, W*C) band is only ~3/W dense and
    # O(W^2*C^2) bytes -- tile W with a 1-column-block halo (keep only diagonal +/-1
    # W-blocks) before scaling up, especially for v7x's 64 MiB VMEM.
    B1 = _band_weights(wt1 * s1, W).astype(compute_dtype)            # (3, WC, WC)
    B2 = _band_weights(wt2 * s2, W).astype(compute_dtype)
    bias1 = jnp.tile(be1 - m1 * s1, W).reshape(1, WC).astype(jnp.float32)
    bias2 = jnp.tile(be2 - m2 * s2, W).reshape(1, WC).astype(jnp.float32)

    # Lane-dense view: (N, H, W*C); reshape is layout plumbing only.
    # TODO(synk): on v7x feed x as bf16 (and optionally a bf16 out_shape) to halve
    # activation DMA bytes when the consumer tolerates a bf16 residual.
    x2d = x_nhwc.astype(jnp.float32).reshape(N, H, WC)

    Nb = _pick_batch_block(N, H)
    grid = (N // Nb,)

    itemsize_c = jnp.dtype(compute_dtype).itemsize
    act_block = Nb * H * WC * 4
    weight_bytes = 2 * 3 * WC * WC * itemsize_c + 2 * WC * 4
    cost = pl.CostEstimate(
        flops=12 * N * H * WC * WC,          # 2 convs x 3 matmuls x 2*M*K*N (band form)
        transcendentals=0,
        bytes_accessed=2 * N * H * WC * 4 + weight_bytes)

    compiler_kwargs = dict(dimension_semantics=("parallel",))
    # x/out double-buffered, weights/bias single-buffered, plus shifted views and
    # f32 accumulators in the body; only raise the scoped limit when needed.
    vmem_need = 2 * 2 * act_block + weight_bytes + 6 * act_block
    if vmem_need > (30 << 20):
        compiler_kwargs["vmem_limit_bytes"] = min(int(vmem_need * 1.25), 64 << 20)

    out2d = pl.pallas_call(
        residual_block_kernel,
        out_shape=jax.ShapeDtypeStruct((N, H, WC), jnp.float32),
        grid=grid,
        in_specs=[
            pl.BlockSpec((Nb, H, WC), lambda n: (n, 0, 0)),   # activation block
            _const_block_spec((3, WC, WC)),                   # conv1 band weights
            _const_block_spec((1, WC)),                       # conv1 BN bias
            _const_block_spec((3, WC, WC)),                   # conv2 band weights
            _const_block_spec((1, WC)),                       # conv2 BN bias
        ],
        out_specs=pl.BlockSpec((Nb, H, WC), lambda n: (n, 0, 0)),
        compiler_params=pltpu.CompilerParams(**compiler_kwargs),
        cost_estimate=cost,
    )(x2d, B1, bias1, B2, bias2)

    return out2d.reshape(N, H, W, Cout)


def residual_block(x_nchw, w1_oihw, bn1, w2_oihw, bn2, eps=1e-5,
                   compute_dtype=jnp.bfloat16):
    """Thin NCHW adapter matching the PyTorch module interface (the transposes
    are interface plumbing; a full NHWC pipeline should call residual_block_nhwc
    directly to avoid two HBM round-trip transposes around a memory-bound kernel)."""
    x = jnp.transpose(x_nchw, (0, 2, 3, 1))
    out = residual_block_nhwc(x, w1_oihw, bn1, w2_oihw, bn2, eps, compute_dtype)
    return jnp.transpose(out, (0, 3, 1, 2))


def reference(x_nchw, w1, bn1, w2, bn2, eps=1e-5):
    """Pure-JAX reference (eval-mode BN) in NCHW for correctness checking."""
    def conv(x, w):
        return lax.conv_general_dilated(
            x, w, window_strides=(1, 1), padding=((1, 1), (1, 1)),
            dimension_numbers=("NCHW", "OIHW", "NCHW"))

    def bn(x, g, b, m, v):
        g, b, m, v = (a[None, :, None, None] for a in (g, b, m, v))
        return (x - m) / jnp.sqrt(v + eps) * g + b

    g1, be1, m1, v1 = bn1
    g2, be2, m2, v2 = bn2
    h = jnp.maximum(bn(conv(x_nchw, w1), g1, be1, m1, v1), 0.0)
    o = bn(conv(h, w2), g2, be2, m2, v2) + x_nchw
    return jnp.maximum(o, 0.0)


if __name__ == "__main__":
    key = jax.random.PRNGKey(0)
    ks = jax.random.split(key, 11)

    N, C, H, W = 4, 8, 16, 16          # W*C == 128 -> perfectly lane-dense
    x = jax.random.normal(ks[0], (N, C, H, W), jnp.float32)

    # conv weights (PyTorch OIHW, no bias)
    w1 = jax.random.normal(ks[1], (C, C, 3, 3), jnp.float32) * 0.1
    w2 = jax.random.normal(ks[2], (C, C, 3, 3), jnp.float32) * 0.1

    # BatchNorm params: (gamma, beta, running_mean, running_var)
    bn1 = (1.0 + 0.1 * jax.random.normal(ks[3], (C,), jnp.float32),
           0.1 * jax.random.normal(ks[4], (C,), jnp.float32),
           0.1 * jax.random.normal(ks[5], (C,), jnp.float32),
           1.0 + 0.1 * jnp.abs(jax.random.normal(ks[6], (C,), jnp.float32)))
    bn2 = (1.0 + 0.1 * jax.random.normal(ks[7], (C,), jnp.float32),
           0.1 * jax.random.normal(ks[8], (C,), jnp.float32),
           0.1 * jax.random.normal(ks[9], (C,), jnp.float32),
           1.0 + 0.1 * jnp.abs(jax.random.normal(ks[10], (C,), jnp.float32)))

    ref = reference(x, w1, bn1, w2, bn2)

    # Exact-math path (f32 MXU operands): tight check against the f32 reference.
    out_f32 = jax.block_until_ready(
        residual_block(x, w1, bn1, w2, bn2, compute_dtype=jnp.float32))
    assert out_f32.shape == x.shape and out_f32.dtype == jnp.float32
    assert jnp.allclose(out_f32, ref, atol=1e-4, rtol=1e-4), "f32 path mismatch"

    # Default fast path (bf16 MXU operands, f32 accumulation/epilogue): loose check.
    out_fast = jax.block_until_ready(residual_block(x, w1, bn1, w2, bn2))
    assert out_fast.shape == x.shape and out_fast.dtype == jnp.float32
    assert jnp.allclose(out_fast, ref, atol=5e-2, rtol=5e-2), "bf16 path mismatch"

    print("KERNEL_OK")
</pallas_src>

<mosaic_0001>
module attributes {stable_mosaic.version = 11 : i64} {
  func.func @residual_block_kernel(%arg0: i32, %arg1: memref<2x16x128xf32, #tpu.memory_space<vmem>>, %arg2: memref<3x128x128xf32, #tpu.memory_space<vmem>>, %arg3: memref<1x128xf32, #tpu.memory_space<vmem>>, %arg4: memref<3x128x128xf32, #tpu.memory_space<vmem>>, %arg5: memref<1x128xf32, #tpu.memory_space<vmem>>, %arg6: memref<2x16x128xf32, #tpu.memory_space<vmem>>) attributes {dimension_semantics = [#tpu.dimension_semantics<parallel>], iteration_bounds = array<i64: 2>, scalar_prefetch = 0 : i64, scratch_operands = 0 : i64, tpu.core_type = #tpu.core_type<tc>, window_params = [{transform_indices = @transform_0, window_bounds = array<i64: 2, 16, 128>}, {pipeline_mode = #tpu.pipeline_mode<synchronous>, transform_indices = @transform_1, window_bounds = array<i64: 3, 128, 128>}, {pipeline_mode = #tpu.pipeline_mode<synchronous>, transform_indices = @transform_2, window_bounds = array<i64: 1, 128>}, {pipeline_mode = #tpu.pipeline_mode<synchronous>, transform_indices = @transform_3, window_bounds = array<i64: 3, 128, 128>}, {pipeline_mode = #tpu.pipeline_mode<synchronous>, transform_indices = @transform_4, window_bounds = array<i64: 1, 128>}, {transform_indices = @transform_5, window_bounds = array<i64: 2, 16, 128>}]} {
    %c0 = arith.constant 0 : index
    %c0_0 = arith.constant 0 : index
    %c0_1 = arith.constant 0 : index
    %0 = vector.load %arg1[%c0, %c0_0, %c0_1] : memref<2x16x128xf32, #tpu.memory_space<vmem>>, vector<2x16x128xf32>
    %cst = arith.constant 0.000000e+00 : f32
    %1 = vector.broadcast %cst : f32 to vector<2x1x128xf32>
    %2 = vector.extract_strided_slice %0 {offsets = [0, 0, 0], sizes = [2, 15, 128], strides = [1, 1, 1]} : vector<2x16x128xf32> to vector<2x15x128xf32>
    %3 = tpu.concatenate %1, %2 in 1 : vector<2x1x128xf32>, vector<2x15x128xf32> -> vector<2x16x128xf32>
    %4 = vector.extract_strided_slice %0 {offsets = [0, 1, 0], sizes = [2, 15, 128], strides = [1, 1, 1]} : vector<2x16x128xf32> to vector<2x15x128xf32>
    %5 = tpu.concatenate %4, %1 in 1 : vector<2x15x128xf32>, vector<2x1x128xf32> -> vector<2x16x128xf32>
    %6 = vector.shape_cast %3 : vector<2x16x128xf32> to vector<32x128xf32>
    %c0_2 = arith.constant 0 : index
    %c0_3 = arith.constant 0 : index
    %c0_4 = arith.constant 0 : index
    %7 = vector.load %arg2[%c0_2, %c0_3, %c0_4] : memref<3x128x128xf32, #tpu.memory_space<vmem>>, vector<1x128x128xf32>
    %8 = vector.shape_cast %7 : vector<1x128x128xf32> to vector<128x128xf32>
    %cst_5 = arith.constant dense<0.000000e+00> : vector<32x128xf32>
    %9 = tpu.matmul %6, %8, %cst_5 {dimension_numbers = #tpu.dot_dimension_numbers<[1], [0], [0], [1], [0, 0, 1, 1], [], []>} : vector<32x128xf32>, vector<128x128xf32>, vector<32x128xf32> -> vector<32x128xf32>
    %10 = vector.shape_cast %0 : vector<2x16x128xf32> to vector<32x128xf32>
    %c1 = arith.constant 1 : index
    %c0_6 = arith.constant 0 : index
    %c0_7 = arith.constant 0 : index
    %11 = vector.load %arg2[%c1, %c0_6, %c0_7] : memref<3x128x128xf32, #tpu.memory_space<vmem>>, vector<1x128x128xf32>
    %12 = vector.shape_cast %11 : vector<1x128x128xf32> to vector<128x128xf32>
    %cst_8 = arith.constant dense<0.000000e+00> : vector<32x128xf32>
    %13 = tpu.matmul %10, %12, %cst_8 {dimension_numbers = #tpu.dot_dimension_numbers<[1], [0], [0], [1], [0, 0, 1, 1], [], []>} : vector<32x128xf32>, vector<128x128xf32>, vector<32x128xf32> -> vector<32x128xf32>
    %14 = arith.addf %9, %13 : vector<32x128xf32>
    %15 = vector.shape_cast %5 : vector<2x16x128xf32> to vector<32x128xf32>
    %c2 = arith.constant 2 : index
    %c0_9 = arith.constant 0 : index
    %c0_10 = arith.constant 0 : index
    %16 = vector.load %arg2[%c2, %c0_9, %c0_10] : memref<3x128x128xf32, #tpu.memory_space<vmem>>, vector<1x128x128xf32>
    %17 = vector.shape_cast %16 : vector<1x128x128xf32> to vector<128x128xf32>
    %cst_11 = arith.constant dense<0.000000e+00> : vector<32x128xf32>
    %18 = tpu.matmul %15, %17, %cst_11 {dimension_numbers = #tpu.dot_dimension_numbers<[1], [0], [0], [1], [0, 0, 1, 1], [], []>} : vector<32x128xf32>, vector<128x128xf32>, vector<32x128xf32> -> vector<32x128xf32>
    %19 = arith.addf %14, %18 : vector<32x128xf32>
    %c0_12 = arith.constant 0 : index
    %c0_13 = arith.constant 0 : index
    %20 = vector.load %arg3[%c0_12, %c0_13] : memref<1x128xf32, #tpu.memory_space<vmem>>, vector<1x128xf32>
    %21 = vector.broadcast %20 : vector<1x128xf32> to vector<32x128xf32>
    %22 = arith.addf %19, %21 : vector<32x128xf32>
    %23 = vector.shape_cast %22 : vector<32x128xf32> to vector<2x16x128xf32>
    %cst_14 = arith.constant 0.000000e+00 : f32
    %24 = vector.broadcast %cst_14 : f32 to vector<2x16x128xf32>
    %25 = arith.maximumf %23, %24 : vector<2x16x128xf32>
    %cst_15 = arith.constant 0.000000e+00 : f32
    %26 = vector.broadcast %cst_15 : f32 to vector<2x1x128xf32>
    %27 = vector.extract_strided_slice %25 {offsets = [0, 0, 0], sizes = [2, 15, 128], strides = [1, 1, 1]} : vector<2x16x128xf32> to vector<2x15x128xf32>
    %28 = tpu.concatenate %26, %27 in 1 : vector<2x1x128xf32>, vector<2x15x128xf32> -> vector<2x16x128xf32>
    %29 = vector.extract_strided_slice %25 {offsets = [0, 1, 0], sizes = [2, 15, 128], strides = [1, 1, 1]} : vector<2x16x128xf32> to vector<2x15x128xf32>
    %30 = tpu.concatenate %29, %26 in 1 : vector<2x15x128xf32>, vector<2x1x128xf32> -> vector<2x16x128xf32>
    %31 = vector.shape_cast %28 : vector<2x16x128xf32> to vector<32x128xf32>
    %c0_16 = arith.constant 0 : index
    %c0_17 = arith.constant 0 : index
    %c0_18 = arith.constant 0 : index
    %32 = vector.load %arg4[%c0_16, %c0_17, %c0_18] : memref<3x128x128xf32, #tpu.memory_space<vmem>>, vector<1x128x128xf32>
    %33 = vector.shape_cast %32 : vector<1x128x128xf32> to vector<128x128xf32>
    %cst_19 = arith.constant dense<0.000000e+00> : vector<32x128xf32>
    %34 = tpu.matmul %31, %33, %cst_19 {dimension_numbers = #tpu.dot_dimension_numbers<[1], [0], [0], [1], [0, 0, 1, 1], [], []>} : vector<32x128xf32>, vector<128x128xf32>, vector<32x128xf32> -> vector<32x128xf32>
    %35 = vector.shape_cast %25 : vector<2x16x128xf32> to vector<32x128xf32>
    %c1_20 = arith.constant 1 : index
    %c0_21 = arith.constant 0 : index
    %c0_22 = arith.constant 0 : index
    %36 = vector.load %arg4[%c1_20, %c0_21, %c0_22] : memref<3x128x128xf32, #tpu.memory_space<vmem>>, vector<1x128x128xf32>
    %37 = vector.shape_cast %36 : vector<1x128x128xf32> to vector<128x128xf32>
    %cst_23 = arith.constant dense<0.000000e+00> : vector<32x128xf32>
    %38 = tpu.matmul %35, %37, %cst_23 {dimension_numbers = #tpu.dot_dimension_numbers<[1], [0], [0], [1], [0, 0, 1, 1], [], []>} : vector<32x128xf32>, vector<128x128xf32>, vector<32x128xf32> -> vector<32x128xf32>
    %39 = arith.addf %34, %38 : vector<32x128xf32>
    %40 = vector.shape_cast %30 : vector<2x16x128xf32> to vector<32x128xf32>
    %c2_24 = arith.constant 2 : index
    %c0_25 = arith.constant 0 : index
    %c0_26 = arith.constant 0 : index
    %41 = vector.load %arg4[%c2_24, %c0_25, %c0_26] : memref<3x128x128xf32, #tpu.memory_space<vmem>>, vector<1x128x128xf32>
    %42 = vector.shape_cast %41 : vector<1x128x128xf32> to vector<128x128xf32>
    %cst_27 = arith.constant dense<0.000000e+00> : vector<32x128xf32>
    %43 = tpu.matmul %40, %42, %cst_27 {dimension_numbers = #tpu.dot_dimension_numbers<[1], [0], [0], [1], [0, 0, 1, 1], [], []>} : vector<32x128xf32>, vector<128x128xf32>, vector<32x128xf32> -> vector<32x128xf32>
    %44 = arith.addf %39, %43 : vector<32x128xf32>
    %c0_28 = arith.constant 0 : index
    %c0_29 = arith.constant 0 : index
    %45 = vector.load %arg5[%c0_28, %c0_29] : memref<1x128xf32, #tpu.memory_space<vmem>>, vector<1x128xf32>
    %46 = vector.broadcast %45 : vector<1x128xf32> to vector<32x128xf32>
    %47 = arith.addf %44, %46 : vector<32x128xf32>
    %48 = vector.shape_cast %47 : vector<32x128xf32> to vector<2x16x128xf32>
    %49 = arith.addf %48, %0 : vector<2x16x128xf32>
    %cst_30 = arith.constant 0.000000e+00 : f32
    %50 = vector.broadcast %cst_30 : f32 to vector<2x16x128xf32>
    %51 = arith.maximumf %49, %50 : vector<2x16x128xf32>
    %c0_31 = arith.constant 0 : index
    %c0_32 = arith.constant 0 : index
    %c0_33 = arith.constant 0 : index
    %52 = vector.load %arg6[%c0_31, %c0_32, %c0_33] : memref<2x16x128xf32, #tpu.memory_space<vmem>>, vector<2x16x128xf32>
    tpu.vector_store %arg6[%c0_31, %c0_32, %c0_33], %51 {strides = array<i32>} : memref<2x16x128xf32, #tpu.memory_space<vmem>>, vector<2x16x128xf32>,
    return
  }
  func.func @transform_0(%arg0: i32) -> (i32, i32, i32) {
    %c0_i32 = arith.constant 0 : i32
    %c0_i32_0 = arith.constant 0 : i32
    %c0_i32_1 = arith.constant 0 : i32
    return %arg0, %c0_i32, %c0_i32_0 : i32, i32, i32
  }
  func.func @transform_1(%arg0: i32) -> (i32, i32, i32) {
    %c0_i32 = arith.constant 0 : i32
    %c0_i32_0 = arith.constant 0 : i32
    %c0_i32_1 = arith.constant 0 : i32
    %c0_i32_2 = arith.constant 0 : i32
    return %c0_i32, %c0_i32_0, %c0_i32_1 : i32, i32, i32
  }
  func.func @transform_2(%arg0: i32) -> (i32, i32) {
    %c0_i32 = arith.constant 0 : i32
    %c0_i32_0 = arith.constant 0 : i32
    %c0_i32_1 = arith.constant 0 : i32
    return %c0_i32, %c0_i32_0 : i32, i32
  }
  func.func @transform_3(%arg0: i32) -> (i32, i32, i32) {
    %c0_i32 = arith.constant 0 : i32
    %c0_i32_0 = arith.constant 0 : i32
    %c0_i32_1 = arith.constant 0 : i32
    %c0_i32_2 = arith.constant 0 : i32
    return %c0_i32, %c0_i32_0, %c0_i32_1 : i32, i32, i32
  }
  func.func @transform_4(%arg0: i32) -> (i32, i32) {
    %c0_i32 = arith.constant 0 : i32
    %c0_i32_0 = arith.constant 0 : i32
    %c0_i32_1 = arith.constant 0 : i32
    return %c0_i32, %c0_i32_0 : i32, i32
  }
  func.func @transform_5(%arg0: i32) -> (i32, i32, i32) {
    %c0_i32 = arith.constant 0 : i32
    %c0_i32_0 = arith.constant 0 : i32
    %c0_i32_1 = arith.constant 0 : i32
    return %arg0, %c0_i32, %c0_i32_0 : i32, i32, i32
  }
}

</mosaic_0001>

<llo_original>
// kernel: tpu_custom_call.1
$region0: #{tpu_custom_call.1}
  #allocation0 [shape = 'u32[]', space=smem, size = 0x4, offset = 0x4, fixed_abs, tag = 'smem constant byte address 0x4 - core index']
  #allocation1 [shape = 'u32[144,128]{1,0:T(1,128)}', space=vmem, size = 0x12000, scoped, tag = 'internal scratch']
  %s0 = inlined_call_operand.hbm [shape: f32[4,16,128], index: 0, kind: input, shape index: {}]
  %s1 = inlined_call_operand.hbm [shape: f32[3,128,128], index: 1, kind: input, shape index: {}]
  %s2 = inlined_call_operand.vmem [shape: f32[1,128], index: 2, kind: input, shape index: {}]
  %s3 = inlined_call_operand.hbm [shape: f32[3,128,128], index: 3, kind: input, shape index: {}]
  %s4 = inlined_call_operand.vmem [shape: f32[1,128], index: 4, kind: input, shape index: {}]
  %s5 = inlined_call_operand.hbm [shape: f32[4,16,128], index: 5, kind: output, shape index: {}]
  %s6 = sld [smem:[#allocation0]]
  $region65: #{tpu_custom_call.1} parent=0
    _
  %s8 = ssub.s32 1, %s6
  %s9 = scalar_select 0, %s8, %s6
  $region1: #{tpu_custom_call.1} parent=0
    #allocation2 [shape = 'u8[32768]{0}', space=vmem, size = 0x8000, scoped, tag = 'input window, operand 0']
    #allocation3 [shape = 's32[2]{0}', space=sflag, size = 0x8, scoped, tag = 'scoped memory for tpu_custom_call.1']
    #allocation4 [shape = 's32[2]{0}', space=sflag, size = 0x8, scoped, tag = 'scoped memory for tpu_custom_call.1']
    #allocation5 [shape = 'u8[196608]{0}', space=vmem, size = 0x30000, scoped, tag = 'input window, operand 1, single buffered']
    #allocation6 [shape = 's32[1]{0}', space=sflag, size = 0x4, scoped, tag = 'scoped memory for tpu_custom_call.1']
    #allocation7 [shape = 'u8[196608]{0}', space=vmem, size = 0x30000, scoped, tag = 'input window, operand 3, single buffered']
    #allocation8 [shape = 'u8[32768]{0}', space=vmem, size = 0x8000, scoped, tag = 'output window, operand 0']
    %10 = vsyncpa [#allocation3], 0
    %s11 = scalar_lea.sflag [#allocation3], 1
    %12 = vsyncpa %s11, 0
    %13 = vsyncpa [#allocation6], 0
    %14 = vsyncpa [#allocation4], 0
    %s15 = scalar_lea.sflag [#allocation4], 1
    %16 = vsyncpa %s15, 0
    loop: start=0, step=1, limit=4
    $region2: #{tpu_custom_call.1} parent=1 // loop_pre_header
      _
    $region3: #{tpu_custom_call.1} parent=1 // loop_header
      %s18 = sphi 0, %s22
      %p19 = scmp.ge.s32.totalorder %s18, 4
      %s28 = sphi 0, %s30
      %s31 = sphi 0, %s28
      %s32 = sphi 0, %s31
      %s48 = sphi 0, %s32
      %s52 = sphi 0, %s52
      %s54 = sphi 0, %s52
      %s55 = sphi 0, %s54
      %s69 = sphi 0, %s55
      %s73 = sphi 0, %s73
      %s75 = sphi 0, %s73
      %s76 = sphi 0, %s75
      %s90 = sphi 0, %s76
      %s94 = sphi 0, %s94
      %s96 = sphi 0, %s94
      %s97 = sphi 0, %s96
      %s111 = sphi 0, %s97
      %s115 = sphi 0, %s115
      %s117 = sphi 0, %s115
      %s118 = sphi 0, %s117
      %s132 = sphi 0, %s118
      %s138 = sphi 0, %s140
      %s141 = sphi 0, %s138
      %s142 = sphi 0, %s141
      %s158 = sphi 0, %s142
    $region4: #{tpu_custom_call.1} parent=1 // loop_header_branch
      %21 = sbr.rel (%p19) target = $region8
    $region5: #{tpu_custom_call.1} parent=1 // loop_body
      %s23 = ssub.s32 %s18, 1
      %s24 = ssub.s32 %s18, 2
      %s25 = sadd.s32 %s18, 1
      %s26 = ssub.s32 %s18, %s25
      %p27 = scmp.eq.s32.totalorder %s26, 0
      %s29 = sadd.s32 %s28, 1
      %s30 = scalar_select %p27, %s28, %s29
      %p33 = pneg %p27
      %p34 = scmp.eq.s32.totalorder %s18, 1
      %p35 = por %p33, %p34
      %p36 = scmp.ne.s32.totalorder %s28, %s31
      %p37 = scmp.eq.s32.totalorder %s18, 0
      %p38 = por %p36, %p37
      %p39 = scmp.ne.s32.totalorder %s28, %s31
      %p40 = scmp.eq.s32.totalorder %s23, 1
      %p41 = por %p39, %p40
      %p42 = scmp.ne.s32.totalorder %s31, %s32
      %p43 = scmp.eq.s32.totalorder %s23, 0
      %p44 = por %p42, %p43
      %p45 = scmp.ne.s32.totalorder %s31, %s32
      %p46 = scmp.eq.s32.totalorder %s24, 1
      %p47 = por %p45, %p46
      %p49 = scmp.ne.s32.totalorder %s32, %s48
      %p50 = scmp.eq.s32.totalorder %s24, 0
      %p51 = por %p49, %p50
      %s53 = sadd.s32 %s52, 1
      %p56 = scmp.eq.s32.totalorder %s18, 1
      %p57 = scmp.ne.s32.totalorder %s52, %s54
      %p58 = scmp.eq.s32.totalorder %s18, 0
      %p59 = por %p57, %p58
      %p60 = scmp.ne.s32.totalorder %s52, %s54
      %p61 = scmp.eq.s32.totalorder %s23, 1
      %p62 = por %p60, %p61
      %p63 = scmp.ne.s32.totalorder %s54, %s55
      %p64 = scmp.eq.s32.totalorder %s23, 0
      %p65 = por %p63, %p64
      %p66 = scmp.ne.s32.totalorder %s54, %s55
      %p67 = scmp.eq.s32.totalorder %s24, 1
      %p68 = por %p66, %p67
      %p70 = scmp.ne.s32.totalorder %s55, %s69
      %p71 = scmp.eq.s32.totalorder %s24, 0
      %p72 = por %p70, %p71
      %s74 = sadd.s32 %s73, 1
      %p77 = scmp.eq.s32.totalorder %s18, 1
      %p78 = scmp.ne.s32.totalorder %s73, %s75
      %p79 = scmp.eq.s32.totalorder %s18, 0
      %p80 = por %p78, %p79
      %p81 = scmp.ne.s32.totalorder %s73, %s75
      %p82 = scmp.eq.s32.totalorder %s23, 1
      %p83 = por %p81, %p82
      %p84 = scmp.ne.s32.totalorder %s75, %s76
      %p85 = scmp.eq.s32.totalorder %s23, 0
      %p86 = por %p84, %p85
      %p87 = scmp.ne.s32.totalorder %s75, %s76
      %p88 = scmp.eq.s32.totalorder %s24, 1
      %p89 = por %p87, %p88
      %p91 = scmp.ne.s32.totalorder %s76, %s90
      %p92 = scmp.eq.s32.totalorder %s24, 0
      %p93 = por %p91, %p92
      %s95 = sadd.s32 %s94, 1
      %p98 = scmp.eq.s32.totalorder %s18, 1
      %p99 = scmp.ne.s32.totalorder %s94, %s96
      %p100 = scmp.eq.s32.totalorder %s18, 0
      %p101 = por %p99, %p100
      %p102 = scmp.ne.s32.totalorder %s94, %s96
      %p103 = scmp.eq.s32.totalorder %s23, 1
      %p104 = por %p102, %p103
      %p105 = scmp.ne.s32.totalorder %s96, %s97
      %p106 = scmp.eq.s32.totalorder %s23, 0
      %p107 = por %p105, %p106
      %p108 = scmp.ne.s32.totalorder %s96, %s97
      %p109 = scmp.eq.s32.totalorder %s24, 1
      %p110 = por %p108, %p109
      %p112 = scmp.ne.s32.totalorder %s97, %s111
      %p113 = scmp.eq.s32.totalorder %s24, 0
      %p114 = por %p112, %p113
      %s116 = sadd.s32 %s115, 1
      %p119 = scmp.eq.s32.totalorder %s18, 1
      %p120 = scmp.ne.s32.totalorder %s115, %s117
      %p121 = scmp.eq.s32.totalorder %s18, 0
      %p122 = por %p120, %p121
      %p123 = scmp.ne.s32.totalorder %s115, %s117
      %p124 = scmp.eq.s32.totalorder %s23, 1
      %p125 = por %p123, %p124
      %p126 = scmp.ne.s32.totalorder %s117, %s118
      %p127 = scmp.eq.s32.totalorder %s23, 0
      %p128 = por %p126, %p127
      %p129 = scmp.ne.s32.totalorder %s117, %s118
      %p130 = scmp.eq.s32.totalorder %s24, 1
      %p131 = por %p129, %p130
      %p133 = scmp.ne.s32.totalorder %s118, %s132
      %p134 = scmp.eq.s32.totalorder %s24, 0
      %p135 = por %p133, %p134
      %s136 = ssub.s32 %s18, %s25
      %p137 = scmp.eq.s32.totalorder %s136, 0
      %s139 = sadd.s32 %s138, 1
      %s140 = scalar_select %p137, %s138, %s139
      %p143 = pneg %p137
      %p144 = scmp.eq.s32.totalorder %s18, 1
      %p145 = por %p143, %p144
      %p146 = scmp.ne.s32.totalorder %s138, %s141
      %p147 = scmp.eq.s32.totalorder %s18, 0
      %p148 = por %p146, %p147
      %p149 = scmp.ne.s32.totalorder %s138, %s141
      %p150 = scmp.eq.s32.totalorder %s23, 1
      %p151 = por %p149, %p150
      %p152 = scmp.ne.s32.totalorder %s141, %s142
      %p153 = scmp.eq.s32.totalorder %s23, 0
      %p154 = por %p152, %p153
      %p155 = scmp.ne.s32.totalorder %s141, %s142
      %p156 = scmp.eq.s32.totalorder %s24, 1
      %p157 = por %p155, %p156
      %p159 = scmp.ne.s32.totalorder %s142, %s158
      %p160 = scmp.eq.s32.totalorder %s24, 0
      %p161 = por %p159, %p160
      %p162 = scmp.le.s32.totalorder 1, %s18
      %p163 = scmp.lt.s32.totalorder %s18, 3
      %p164 = pnand %p162, %p163
      %p165 = pneg %p164
      // Predicated region
      $region9: #{tpu_custom_call.1} parent=5 // pred_check
        _
      $region10: #{tpu_custom_call.1} parent=5 // pred_check_branch
        %167 = sbr.rel (%p164) target = $region12
      $region11: #{tpu_custom_call.1} parent=5 // pred_region
        %s168 = ssub.s32 %s18, 1
        // Predicated region
        $region13: #{tpu_custom_call.1} parent=11 // pred_check
          %p169 = pneg %p65
        $region14: #{tpu_custom_call.1} parent=11 // pred_check_branch
          %171 = sbr.rel (%p169) target = $region16
        $region15: #{tpu_custom_call.1} parent=11 // pred_region
          %s173 = ssub.s32 6144, 6144
          %174 = vsyncadd [#allocation6], %s173
          %s175 = sshll.u32 [#allocation5], 4
          %s176 = int_to_ptr.vmem [resolvable:$true] %s175
          %181 = dma.hbm_to_vmem [thread:$0]  %s1, 6144, %s176, [#allocation6], 128, 128, 8
        $region16: #{tpu_custom_call.1} parent=11 // pred_fallthru
          _
        // Predicated region
        $region17: #{tpu_custom_call.1} parent=11 // pred_check
          %p182 = pneg %p86
        $region18: #{tpu_custom_call.1} parent=11 // pred_check_branch
          %184 = sbr.rel (%p182) target = $region20
        $region19: #{tpu_custom_call.1} parent=11 // pred_region
          _
        $region20: #{tpu_custom_call.1} parent=11 // pred_fallthru
          _
        // Predicated region
        $region21: #{tpu_custom_call.1} parent=11 // pred_check
          %p185 = pneg %p107
        $region22: #{tpu_custom_call.1} parent=11 // pred_check_branch
          %187 = sbr.rel (%p185) target = $region24
        $region23: #{tpu_custom_call.1} parent=11 // pred_region
          %s189 = ssub.s32 6144, 6144
          %190 = vsyncadd [#allocation6], %s189
          %s191 = sshll.u32 [#allocation7], 4
          %s192 = int_to_ptr.vmem [resolvable:$true] %s191
          %197 = dma.hbm_to_vmem [thread:$0]  %s3, 6144, %s192, [#allocation6], 128, 128, 8
        $region24: #{tpu_custom_call.1} parent=11 // pred_fallthru
          _
        // Predicated region
        $region25: #{tpu_custom_call.1} parent=11 // pred_check
          %p198 = pneg %p128
        $region26: #{tpu_custom_call.1} parent=11 // pred_check_branch
          %200 = sbr.rel (%p198) target = $region28
        $region27: #{tpu_custom_call.1} parent=11 // pred_region
          _
        $region28: #{tpu_custom_call.1} parent=11 // pred_fallthru
          _
      $region12: #{tpu_custom_call.1} parent=5 // pred_fallthru
        _
      %p201 = scmp.lt.s32.totalorder %s18, 2
      // Predicated region
      $region29: #{tpu_custom_call.1} parent=5 // pred_check
        %p202 = pneg %p201
      $region30: #{tpu_custom_call.1} parent=5 // pred_check_branch
        %204 = sbr.rel (%p202) target = $region32
      $region31: #{tpu_custom_call.1} parent=5 // pred_region
        // Predicated region
        $region33: #{tpu_custom_call.1} parent=31 // pred_check
          %p205 = pneg %p38
        $region34: #{tpu_custom_call.1} parent=31 // pred_check_branch
          %207 = sbr.rel (%p205) target = $region36
        $region35: #{tpu_custom_call.1} parent=31 // pred_region
          %s208 = sand.u32 %s28, 1
          %s209 = scalar_lea.sflag [#allocation3], %s208
          %s210 = sand.u32 %s28, 1
          %s211 = smul.addr %s210, 32
          %s212 = scalar_lea.vmem [#allocation2], %s211
          %s213 = smul.u32 2, %s18
          %s215 = ssub.s32 512, 512
          %216 = vsyncadd %s209, %s215
          %s217 = smul.addr %s213, 2
          %s218 = smul.addr %s217, 128
          %s219 = scalar_lea.hbm %s0, %s218
          %s220 = sshll.u32 %s212, 4
          %s221 = int_to_ptr.vmem [resolvable:$true] %s220
          %226 = dma.hbm_to_vmem [thread:$0]  %s219, 512, %s221, %s209, 128, 128, 8
        $region36: #{tpu_custom_call.1} parent=31 // pred_fallthru
          _
      $region32: #{tpu_custom_call.1} parent=5 // pred_fallthru
        _
      %p227 = scmp.le.s32.totalorder 1, %s18
      %p228 = scmp.lt.s32.totalorder %s18, 3
      %p229 = pnand %p227, %p228
      %p230 = pneg %p229
      // Predicated region
      $region37: #{tpu_custom_call.1} parent=5 // pred_check
        _
      $region38: #{tpu_custom_call.1} parent=5 // pred_check_branch
        %232 = sbr.rel (%p229) target = $region40
      $region39: #{tpu_custom_call.1} parent=5 // pred_region
        %s233 = ssub.s32 %s18, 1
        %s234 = sand.u32 %s31, 1
        %s235 = scalar_lea.sflag [#allocation3], %s234
        %s236 = sand.u32 %s31, 1
        %s237 = smul.addr %s236, 32
        %s238 = scalar_lea.vmem [#allocation2], %s237
        // Predicated region
        $region41: #{tpu_custom_call.1} parent=39 // pred_check
          %p239 = pneg %p44
        $region42: #{tpu_custom_call.1} parent=39 // pred_check_branch
          %241 = sbr.rel (%p239) target = $region44
        $region43: #{tpu_custom_call.1} parent=39 // pred_region
          %242 = dma.done %s235, 512
        $region44: #{tpu_custom_call.1} parent=39 // pred_fallthru
          _
        // Predicated region
        $region45: #{tpu_custom_call.1} parent=39 // pred_check
          %p243 = pneg %p65
        $region46: #{tpu_custom_call.1} parent=39 // pred_check_branch
          %245 = sbr.rel (%p243) target = $region48
        $region47: #{tpu_custom_call.1} parent=39 // pred_region
          %246 = dma.done [#allocation6], 6144
        $region48: #{tpu_custom_call.1} parent=39 // pred_fallthru
          _
        // Predicated region
        $region49: #{tpu_custom_call.1} parent=39 // pred_check
          %p247 = pneg %p107
        $region50: #{tpu_custom_call.1} parent=39 // pred_check_branch
          %249 = sbr.rel (%p247) target = $region52
        $region51: #{tpu_custom_call.1} parent=39 // pred_region
          %250 = dma.done [#allocation6], 6144
        $region52: #{tpu_custom_call.1} parent=39 // pred_fallthru
          _
        %s251 = sand.u32 %s31, 1
        %s252 = scalar_lea.sflag [#allocation3], %s251
        %s253 = sand.u32 %s31, 1
        %s254 = smul.addr %s253, 32
        %s255 = scalar_lea.vmem [#allocation2], %s254
        %p256 = pneg %p44
        %p257 = pneg %p41
        %p258 = pneg %p65
        %p259 = pneg %p62
        %p260 = pneg %p86
        %p261 = pneg %p83
        %p262 = pneg %p107
        %p263 = pneg %p104
        %p264 = pneg %p128
        %p265 = pneg %p125
        %p266 = pneg %p154
        %p267 = pneg %p151
        %s268 = sand.u32 %s141, 1
        %s269 = scalar_lea.sflag [#allocation4], %s268
        %s270 = sand.u32 %s141, 1
        %s271 = smul.addr %s270, 32
        %s272 = scalar_lea.vmem [#allocation8], %s271
        %s273 = smul.u32 2, %s23
        %s274 = smul.u32 2, %s23
        %v275 = vld [vmem:[%s238] sm:$0xff]
        %v276 = vld [vmem:[%s238 + $0x8] sm:$0xff]
        %v277 = vld [vmem:[%s238 + $0x10] sm:$0xff]
        %v278 = vld [vmem:[%s238 + $0x18] sm:$0xff]
        %vm283 = vcmask 1040384
        %v284 = vrot.slane %v275, 7
        %v285 = vrot.slane %v276, 7
        %v286 = vsel %vm283, %v284, %v285
        %v287 = vrot.slane %v277, 7
        %v288 = vrot.slane %v278, 7
        %v289 = vsel %vm283, %v287, %v288
        %v294 = vsel %vm283, 0.0, %v284
        %v295 = vsel %vm283, 0.0, %v287
        %vm296 = vcmask 1046528
        %v297 = vrot.slane %v275, 1
        %v298 = vrot.slane %v276, 1
        %v299 = vsel %vm296, %v297, %v298
        %v300 = vrot.slane %v277, 1
        %v301 = vrot.slane %v278, 1
        %v302 = vsel %vm296, %v300, %v301
        %v307 = vsel %vm296, %v298, 0.0
        %v308 = vsel %vm296, %v301, 0.0
        %v309 = vld [vmem:[#allocation5] sm:$0xff]
        %v310 = vld [vmem:[#allocation5 + $0x8] sm:$0xff]
        %v311 = vld [vmem:[#allocation5 + $0x10] sm:$0xff]
        %v312 = vld [vmem:[#allocation5 + $0x18] sm:$0xff]
        %v313 = vld [vmem:[#allocation5 + $0x20] sm:$0xff]
        %v314 = vld [vmem:[#allocation5 + $0x28] sm:$0xff]
        %v315 = vld [vmem:[#allocation5 + $0x30] sm:$0xff]
        %v316 = vld [vmem:[#allocation5 + $0x38] sm:$0xff]
        %v317 = vld [vmem:[#allocation5 + $0x40] sm:$0xff]
        %v318 = vld [vmem:[#allocation5 + $0x48] sm:$0xff]
        %v319 = vld [vmem:[#allocation5 + $0x50] sm:$0xff]
        %v320 = vld [vmem:[#allocation5 + $0x58] sm:$0xff]
        %v321 = vld [vmem:[#allocation5 + $0x60] sm:$0xff]
        %v322 = vld [vmem:[#allocation5 + $0x68] sm:$0xff]
        %v323 = vld [vmem:[#allocation5 + $0x70] sm:$0xff]
        %v324 = vld [vmem:[#allocation5 + $0x78] sm:$0xff]
        %s325 = scalar_lea.vmem [#allocation5], 128
        %v326 = vld [vmem:[%s325] sm:$0xff]
        %v327 = vld [vmem:[%s325 + $0x8] sm:$0xff]
        %v328 = vld [vmem:[%s325 + $0x10] sm:$0xff]
        %v329 = vld [vmem:[%s325 + $0x18] sm:$0xff]
        %v330 = vld [vmem:[%s325 + $0x20] sm:$0xff]
        %v331 = vld [vmem:[%s325 + $0x28] sm:$0xff]
        %v332 = vld [vmem:[%s325 + $0x30] sm:$0xff]
        %v333 = vld [vmem:[%s325 + $0x38] sm:$0xff]
        %v334 = vld [vmem:[%s325 + $0x40] sm:$0xff]
        %v335 = vld [vmem:[%s325 + $0x48] sm:$0xff]
        %v336 = vld [vmem:[%s325 + $0x50] sm:$0xff]
        %v337 = vld [vmem:[%s325 + $0x58] sm:$0xff]
        %v338 = vld [vmem:[%s325 + $0x60] sm:$0xff]
        %v339 = vld [vmem:[%s325 + $0x68] sm:$0xff]
        %v340 = vld [vmem:[%s325 + $0x70] sm:$0xff]
        %v341 = vld [vmem:[%s325 + $0x78] sm:$0xff]
        %342 = vmatprep.subr.mxu0 0.0
        %343 = vmatpush1.msra.mxu0 %v326
        %344 = vmatprep.subr.mxu0 0.0
        %345 = vmatpush1.msra.mxu0 %v327
        %346 = vmatprep.subr.mxu0 0.0
        %347 = vmatpush1.msra.mxu0 %v328
        %348 = vmatprep.subr.mxu0 0.0
        %349 = vmatpush1.msra.mxu0 %v329
        %350 = vmatprep.subr.mxu0 0.0
        %351 = vmatpush1.msra.mxu0 %v330
        %352 = vmatprep.subr.mxu0 0.0
        %353 = vmatpush1.msra.mxu0 %v331
        %354 = vmatprep.subr.mxu0 0.0
        %355 = vmatpush1.msra.mxu0 %v332
        %356 = vmatprep.subr.mxu0 0.0
        %357 = vmatpush1.msra.mxu0 %v333
        %358 = vmatprep.subr.mxu0 0.0
        %359 = vmatpush1.msra.mxu0 %v334
        %360 = vmatprep.subr.mxu0 0.0
        %361 = vmatpush1.msra.mxu0 %v335
        %362 = vmatprep.subr.mxu0 0.0
        %363 = vmatpush1.msra.mxu0 %v336
        %364 = vmatprep.subr.mxu0 0.0
        %365 = vmatpush1.msra.mxu0 %v337
        %366 = vmatprep.subr.mxu0 0.0
        %367 = vmatpush1.msra.mxu0 %v338
        %368 = vmatprep.subr.mxu0 0.0
        %369 = vmatpush1.msra.mxu0 %v339
        %370 = vmatprep.subr.mxu0 0.0
        %371 = vmatpush1.msra.mxu0 %v340
        %372 = vmatprep.subr.mxu0 0.0
        %373 = vmatpush1.msra.mxu0 %v341
        %374 = vmatprep.subr.mxu0 0.0
        %375 = vmatpush1.msra.mxu0 0.0
        %376 = vmatprep.subr.mxu0 0.0
        %377 = vmatpush1.msra.mxu0 0.0
        %378 = vmatprep.subr.mxu0 0.0
        %379 = vmatpush1.msra.mxu0 0.0
        %380 = vmatprep.subr.mxu0 0.0
        %381 = vmatpush1.msra.mxu0 0.0
        %382 = vmatprep.subr.mxu0 0.0
        %383 = vmatpush1.msra.mxu0 0.0
        %384 = vmatprep.subr.mxu0 0.0
        %385 = vmatpush1.msra.mxu0 0.0
        %386 = vmatprep.subr.mxu0 0.0
        %387 = vmatpush1.msra.mxu0 0.0
        %388 = vmatprep.subr.mxu0 0.0
        %389 = vmatpush1.msra.mxu0 0.0
        %390 = vmatprep.subr.mxu0 0.0
        %391 = vmatpush1.msra.mxu0 0.0
        %392 = vmatprep.subr.mxu0 0.0
        %393 = vmatpush1.msra.mxu0 0.0
        %394 = vmatprep.subr.mxu0 0.0
        %395 = vmatpush1.msra.mxu0 0.0
        %396 = vmatprep.subr.mxu0 0.0
        %397 = vmatpush1.msra.mxu0 0.0
        %398 = vmatprep.subr.mxu0 0.0
        %399 = vmatpush1.msra.mxu0 0.0
        %400 = vmatprep.subr.mxu0 0.0
        %401 = vmatpush1.msra.mxu0 0.0
        %402 = vmatprep.subr.mxu0 0.0
        %403 = vmatpush1.msra.mxu0 0.0
        %404 = vmatprep.subr.mxu0 0.0
        %405 = vmatpush1.msra.mxu0 0.0
        %406 = vmatprep.mubr.f32.mxu0 0.0
        %407 = vmatmul.mubr.f32.gmra.mrb[0].mxu0 %v275
        %v408 = vpop.f32.mrb[0].mxu0
        %v409 = vadd.f32 0.0, %v408
        %v410 = vpop.f32.mrb[0].mxu0
        %411 = vmatprep.mubr.f32.mxu0 0.0
        %412 = vmatmul.mubr.f32.gmra.mrb[0].mxu0 %v276
        %v413 = vpop.f32.mrb[0].mxu0
        %v414 = vadd.f32 0.0, %v413
        %v415 = vpop.f32.mrb[0].mxu0
        %416 = vmatprep.mubr.f32.mxu0 0.0
        %417 = vmatmul.mubr.f32.gmra.mrb[0].mxu0 %v277
        %v418 = vpop.f32.mrb[0].mxu0
        %v419 = vadd.f32 0.0, %v418
        %v420 = vpop.f32.mrb[0].mxu0
        %421 = vmatprep.mubr.f32.mxu0 0.0
        %422 = vmatmul.mubr.f32.gmra.mrb[0].mxu0 %v278
        %v423 = vpop.f32.mrb[0].mxu0
        %v424 = vadd.f32 0.0, %v423
        %v425 = vpop.f32.mrb[0].mxu0
        %426 = vdwg.mxu0
        %427 = vmatprep.subr.mxu0 0.0
        %428 = vmatpush1.msra.mxu0 %v309
        %429 = vmatprep.subr.mxu0 0.0
        %430 = vmatpush1.msra.mxu0 %v310
        %431 = vmatprep.subr.mxu0 0.0
        %432 = vmatpush1.msra.mxu0 %v311
        %433 = vmatprep.subr.mxu0 0.0
        %434 = vmatpush1.msra.mxu0 %v312
        %435 = vmatprep.subr.mxu0 0.0
        %436 = vmatpush1.msra.mxu0 %v313
        %437 = vmatprep.subr.mxu0 0.0
        %438 = vmatpush1.msra.mxu0 %v314
        %439 = vmatprep.subr.mxu0 0.0
        %440 = vmatpush1.msra.mxu0 %v315
        %441 = vmatprep.subr.mxu0 0.0
        %442 = vmatpush1.msra.mxu0 %v316
        %443 = vmatprep.subr.mxu0 0.0
        %444 = vmatpush1.msra.mxu0 %v317
        %445 = vmatprep.subr.mxu0 0.0
        %446 = vmatpush1.msra.mxu0 %v318
        %447 = vmatprep.subr.mxu0 0.0
        %448 = vmatpush1.msra.mxu0 %v319
        %449 = vmatprep.subr.mxu0 0.0
        %450 = vmatpush1.msra.mxu0 %v320
        %451 = vmatprep.subr.mxu0 0.0
        %452 = vmatpush1.msra.mxu0 %v321
        %453 = vmatprep.subr.mxu0 0.0
        %454 = vmatpush1.msra.mxu0 %v322
        %455 = vmatprep.subr.mxu0 0.0
        %456 = vmatpush1.msra.mxu0 %v323
        %457 = vmatprep.subr.mxu0 0.0
        %458 = vmatpush1.msra.mxu0 %v324
        %459 = vmatprep.subr.mxu0 0.0
        %460 = vmatpush1.msra.mxu0 0.0
        %461 = vmatprep.subr.mxu0 0.0
        %462 = vmatpush1.msra.mxu0 0.0
        %463 = vmatprep.subr.mxu0 0.0
        %464 = vmatpush1.msra.mxu0 0.0
        %465 = vmatprep.subr.mxu0 0.0
        %466 = vmatpush1.msra.mxu0 0.0
        %467 = vmatprep.subr.mxu0 0.0
        %468 = vmatpush1.msra.mxu0 0.0
        %469 = vmatprep.subr.mxu0 0.0
        %470 = vmatpush1.msra.mxu0 0.0
        %471 = vmatprep.subr.mxu0 0.0
        %472 = vmatpush1.msra.mxu0 0.0
        %473 = vmatprep.subr.mxu0 0.0
        %474 = vmatpush1.msra.mxu0 0.0
        %475 = vmatprep.subr.mxu0 0.0
        %476 = vmatpush1.msra.mxu0 0.0
        %477 = vmatprep.subr.mxu0 0.0
        %478 = vmatpush1.msra.mxu0 0.0
        %479 = vmatprep.subr.mxu0 0.0
        %480 = vmatpush1.msra.mxu0 0.0
        %481 = vmatprep.subr.mxu0 0.0
        %482 = vmatpush1.msra.mxu0 0.0
        %483 = vmatprep.subr.mxu0 0.0
        %484 = vmatpush1.msra.mxu0 0.0
        %485 = vmatprep.subr.mxu0 0.0
        %486 = vmatpush1.msra.mxu0 0.0
        %487 = vmatprep.subr.mxu0 0.0
        %488 = vmatpush1.msra.mxu0 0.0
        %489 = vmatprep.subr.mxu0 0.0
        %490 = vmatpush1.msra.mxu0 0.0
        %491 = vmatprep.mubr.f32.mxu0 0.0
        %492 = vmatmul.mubr.f32.gmra.mrb[0].mxu0 %v294
        %v493 = vpop.f32.mrb[0].mxu0
        %v494 = vadd.f32 %v409, %v493
        %v495 = vpop.f32.mrb[0].mxu0
        %496 = vmatprep.mubr.f32.mxu0 0.0
        %497 = vmatmul.mubr.f32.gmra.mrb[0].mxu0 %v286
        %v498 = vpop.f32.mrb[0].mxu0
        %v499 = vadd.f32 %v414, %v498
        %v500 = vpop.f32.mrb[0].mxu0
        %501 = vmatprep.mubr.f32.mxu0 0.0
        %502 = vmatmul.mubr.f32.gmra.mrb[0].mxu0 %v295
        %v503 = vpop.f32.mrb[0].mxu0
        %v504 = vadd.f32 %v419, %v503
        %v505 = vpop.f32.mrb[0].mxu0
        %506 = vmatprep.mubr.f32.mxu0 0.0
        %507 = vmatmul.mubr.f32.gmra.mrb[0].mxu0 %v289
        %v508 = vpop.f32.mrb[0].mxu0
        %v509 = vadd.f32 %v424, %v508
        %v510 = vpop.f32.mrb[0].mxu0
        %511 = vdwg.mxu0
        %s512 = scalar_lea.vmem [#allocation5], 256
        %v513 = vld [vmem:[%s512] sm:$0xff]
        %v514 = vld [vmem:[%s512 + $0x8] sm:$0xff]
        %v515 = vld [vmem:[%s512 + $0x10] sm:$0xff]
        %v516 = vld [vmem:[%s512 + $0x18] sm:$0xff]
        %v517 = vld [vmem:[%s512 + $0x20] sm:$0xff]
        %v518 = vld [vmem:[%s512 + $0x28] sm:$0xff]
        %v519 = vld [vmem:[%s512 + $0x30] sm:$0xff]
        %v520 = vld [vmem:[%s512 + $0x38] sm:$0xff]
        %v521 = vld [vmem:[%s512 + $0x40] sm:$0xff]
        %v522 = vld [vmem:[%s512 + $0x48] sm:$0xff]
        %v523 = vld [vmem:[%s512 + $0x50] sm:$0xff]
        %v524 = vld [vmem:[%s512 + $0x58] sm:$0xff]
        %v525 = vld [vmem:[%s512 + $0x60] sm:$0xff]
        %v526 = vld [vmem:[%s512 + $0x68] sm:$0xff]
        %v527 = vld [vmem:[%s512 + $0x70] sm:$0xff]
        %v528 = vld [vmem:[%s512 + $0x78] sm:$0xff]
        %529 = vmatprep.subr.mxu0 0.0
        %530 = vmatpush1.msra.mxu0 %v513
        %531 = vmatprep.subr.mxu0 0.0
        %532 = vmatpush1.msra.mxu0 %v514
        %533 = vmatprep.subr.mxu0 0.0
        %534 = vmatpush1.msra.mxu0 %v515
        %535 = vmatprep.subr.mxu0 0.0
        %536 = vmatpush1.msra.mxu0 %v516
        %537 = vmatprep.subr.mxu0 0.0
        %538 = vmatpush1.msra.mxu0 %v517
        %539 = vmatprep.subr.mxu0 0.0
        %540 = vmatpush1.msra.mxu0 %v518
        %541 = vmatprep.subr.mxu0 0.0
        %542 = vmatpush1.msra.mxu0 %v519
        %543 = vmatprep.subr.mxu0 0.0
        %544 = vmatpush1.msra.mxu0 %v520
        %545 = vmatprep.subr.mxu0 0.0
        %546 = vmatpush1.msra.mxu0 %v521
        %547 = vmatprep.subr.mxu0 0.0
        %548 = vmatpush1.msra.mxu0 %v522
        %549 = vmatprep.subr.mxu0 0.0
        %550 = vmatpush1.msra.mxu0 %v523
        %551 = vmatprep.subr.mxu0 0.0
        %552 = vmatpush1.msra.mxu0 %v524
        %553 = vmatprep.subr.mxu0 0.0
        %554 = vmatpush1.msra.mxu0 %v525
        %555 = vmatprep.subr.mxu0 0.0
        %556 = vmatpush1.msra.mxu0 %v526
        %557 = vmatprep.subr.mxu0 0.0
        %558 = vmatpush1.msra.mxu0 %v527
        %559 = vmatprep.subr.mxu0 0.0
        %560 = vmatpush1.msra.mxu0 %v528
        %561 = vmatprep.subr.mxu0 0.0
        %562 = vmatpush1.msra.mxu0 0.0
        %563 = vmatprep.subr.mxu0 0.0
        %564 = vmatpush1.msra.mxu0 0.0
        %565 = vmatprep.subr.mxu0 0.0
        %566 = vmatpush1.msra.mxu0 0.0
        %567 = vmatprep.subr.mxu0 0.0
        %568 = vmatpush1.msra.mxu0 0.0
        %569 = vmatprep.subr.mxu0 0.0
        %570 = vmatpush1.msra.mxu0 0.0
        %571 = vmatprep.subr.mxu0 0.0
        %572 = vmatpush1.msra.mxu0 0.0
        %573 = vmatprep.subr.mxu0 0.0
        %574 = vmatpush1.msra.mxu0 0.0
        %575 = vmatprep.subr.mxu0 0.0
        %576 = vmatpush1.msra.mxu0 0.0
        %577 = vmatprep.subr.mxu0 0.0
        %578 = vmatpush1.msra.mxu0 0.0
        %579 = vmatprep.subr.mxu0 0.0
        %580 = vmatpush1.msra.mxu0 0.0
        %581 = vmatprep.subr.mxu0 0.0
        %582 = vmatpush1.msra.mxu0 0.0
        %583 = vmatprep.subr.mxu0 0.0
        %584 = vmatpush1.msra.mxu0 0.0
        %585 = vmatprep.subr.mxu0 0.0
        %586 = vmatpush1.msra.mxu0 0.0
        %587 = vmatprep.subr.mxu0 0.0
        %588 = vmatpush1.msra.mxu0 0.0
        %589 = vmatprep.subr.mxu0 0.0
        %590 = vmatpush1.msra.mxu0 0.0
        %591 = vmatprep.subr.mxu0 0.0
        %592 = vmatpush1.msra.mxu0 0.0
        %593 = vmatprep.mubr.f32.mxu0 0.0
        %594 = vmatmul.mubr.f32.gmra.mrb[0].mxu0 %v299
        %v595 = vpop.f32.mrb[0].mxu0
        %v596 = vadd.f32 0.0, %v595
        %v597 = vpop.f32.mrb[0].mxu0
        %598 = vmatprep.mubr.f32.mxu0 0.0
        %599 = vmatmul.mubr.f32.gmra.mrb[0].mxu0 %v307
        %v600 = vpop.f32.mrb[0].mxu0
        %v601 = vadd.f32 0.0, %v600
        %v602 = vpop.f32.mrb[0].mxu0
        %603 = vmatprep.mubr.f32.mxu0 0.0
        %604 = vmatmul.mubr.f32.gmra.mrb[0].mxu0 %v302
        %v605 = vpop.f32.mrb[0].mxu0
        %v606 = vadd.f32 0.0, %v605
        %v607 = vpop.f32.mrb[0].mxu0
        %608 = vmatprep.mubr.f32.mxu0 0.0
        %609 = vmatmul.mubr.f32.gmra.mrb[0].mxu0 %v308
        %v610 = vpop.f32.mrb[0].mxu0
        %v611 = vadd.f32 0.0, %v610
        %v612 = vpop.f32.mrb[0].mxu0
        %613 = vdwg.mxu0
        %v614 = vadd.f32 %v494, %v596
        %v615 = vadd.f32 %v499, %v601
        %v616 = vadd.f32 %v504, %v606
        %v617 = vadd.f32 %v509, %v611
        %v618 = vld [vmem:[%s2] sm:$0x1]
        %v620 = vlaneseq
        %v621 = vshrl.u32 %v620, 7
        %v622 = vsub.s32 0, %v621
        %v623 = vrot.slane %v618, %v622
        %v625 = vadd.f32 %v614, %v623
        %v626 = vadd.f32 %v615, %v623
        %v627 = vadd.f32 %v616, %v623
        %v628 = vadd.f32 %v617, %v623
        %v629 = vmax.f32 %v625, 0.0
        %v630 = vmax.f32 %v626, 0.0
        %v631 = vmax.f32 %v627, 0.0
        %v632 = vmax.f32 %v628, 0.0
        %v637 = vrot.slane %v629, 7
        %v638 = vrot.slane %v630, 7
        %v639 = vsel %vm283, %v637, %v638
        %v640 = vrot.slane %v631, 7
        %v641 = vrot.slane %v632, 7
        %v642 = vsel %vm283, %v640, %v641
        %v647 = vsel %vm283, 0.0, %v637
        %v648 = vsel %vm283, 0.0, %v640
        %v649 = vrot.slane %v629, 1
        %v650 = vrot.slane %v630, 1
        %v651 = vsel %vm296, %v649, %v650
        %v652 = vrot.slane %v631, 1
        %v653 = vrot.slane %v632, 1
        %v654 = vsel %vm296, %v652, %v653
        %v659 = vsel %vm296, %v650, 0.0
        %v660 = vsel %vm296, %v653, 0.0
        %v661 = vld [vmem:[#allocation7] sm:$0xff]
        %v662 = vld [vmem:[#allocation7 + $0x8] sm:$0xff]
        %v663 = vld [vmem:[#allocation7 + $0x10] sm:$0xff]
        %v664 = vld [vmem:[#allocation7 + $0x18] sm:$0xff]
        %v665 = vld [vmem:[#allocation7 + $0x20] sm:$0xff]
        %v666 = vld [vmem:[#allocation7 + $0x28] sm:$0xff]
        %v667 = vld [vmem:[#allocation7 + $0x30] sm:$0xff]
        %v668 = vld [vmem:[#allocation7 + $0x38] sm:$0xff]
        %v669 = vld [vmem:[#allocation7 + $0x40] sm:$0xff]
        %v670 = vld [vmem:[#allocation7 + $0x48] sm:$0xff]
        %v671 = vld [vmem:[#allocation7 + $0x50] sm:$0xff]
        %v672 = vld [vmem:[#allocation7 + $0x58] sm:$0xff]
        %v673 = vld [vmem:[#allocation7 + $0x60] sm:$0xff]
        %v674 = vld [vmem:[#allocation7 + $0x68] sm:$0xff]
        %v675 = vld [vmem:[#allocation7 + $0x70] sm:$0xff]
        %v676 = vld [vmem:[#allocation7 + $0x78] sm:$0xff]
        %s677 = scalar_lea.vmem [#allocation7], 128
        %v678 = vld [vmem:[%s677] sm:$0xff]
        %v679 = vld [vmem:[%s677 + $0x8] sm:$0xff]
        %v680 = vld [vmem:[%s677 + $0x10] sm:$0xff]
        %v681 = vld [vmem:[%s677 + $0x18] sm:$0xff]
        %v682 = vld [vmem:[%s677 + $0x20] sm:$0xff]
        %v683 = vld [vmem:[%s677 + $0x28] sm:$0xff]
        %v684 = vld [vmem:[%s677 + $0x30] sm:$0xff]
        %v685 = vld [vmem:[%s677 + $0x38] sm:$0xff]
        %v686 = vld [vmem:[%s677 + $0x40] sm:$0xff]
        %v687 = vld [vmem:[%s677 + $0x48] sm:$0xff]
        %v688 = vld [vmem:[%s677 + $0x50] sm:$0xff]
        %v689 = vld [vmem:[%s677 + $0x58] sm:$0xff]
        %v690 = vld [vmem:[%s677 + $0x60] sm:$0xff]
        %v691 = vld [vmem:[%s677 + $0x68] sm:$0xff]
        %v692 = vld [vmem:[%s677 + $0x70] sm:$0xff]
        %v693 = vld [vmem:[%s677 + $0x78] sm:$0xff]
        %694 = vmatprep.subr.mxu0 0.0
        %695 = vmatpush1.msra.mxu0 %v678
        %696 = vmatprep.subr.mxu0 0.0
        %697 = vmatpush1.msra.mxu0 %v679
        %698 = vmatprep.subr.mxu0 0.0
        %699 = vmatpush1.msra.mxu0 %v680
        %700 = vmatprep.subr.mxu0 0.0
        %701 = vmatpush1.msra.mxu0 %v681
        %702 = vmatprep.subr.mxu0 0.0
        %703 = vmatpush1.msra.mxu0 %v682
        %704 = vmatprep.subr.mxu0 0.0
        %705 = vmatpush1.msra.mxu0 %v683
        %706 = vmatprep.subr.mxu0 0.0
        %707 = vmatpush1.msra.mxu0 %v684
        %708 = vmatprep.subr.mxu0 0.0
        %709 = vmatpush1.msra.mxu0 %v685
        %710 = vmatprep.subr.mxu0 0.0
        %711 = vmatpush1.msra.mxu0 %v686
        %712 = vmatprep.subr.mxu0 0.0
        %713 = vmatpush1.msra.mxu0 %v687
        %714 = vmatprep.subr.mxu0 0.0
        %715 = vmatpush1.msra.mxu0 %v688
        %716 = vmatprep.subr.mxu0 0.0
        %717 = vmatpush1.msra.mxu0 %v689
        %718 = vmatprep.subr.mxu0 0.0
        %719 = vmatpush1.msra.mxu0 %v690
        %720 = vmatprep.subr.mxu0 0.0
        %721 = vmatpush1.msra.mxu0 %v691
        %722 = vmatprep.subr.mxu0 0.0
        %723 = vmatpush1.msra.mxu0 %v692
        %724 = vmatprep.subr.mxu0 0.0
        %725 = vmatpush1.msra.mxu0 %v693
        %726 = vmatprep.subr.mxu0 0.0
        %727 = vmatpush1.msra.mxu0 0.0
        %728 = vmatprep.subr.mxu0 0.0
        %729 = vmatpush1.msra.mxu0 0.0
        %730 = vmatprep.subr.mxu0 0.0
        %731 = vmatpush1.msra.mxu0 0.0
        %732 = vmatprep.subr.mxu0 0.0
        %733 = vmatpush1.msra.mxu0 0.0
        %734 = vmatprep.subr.mxu0 0.0
        %735 = vmatpush1.msra.mxu0 0.0
        %736 = vmatprep.subr.mxu0 0.0
        %737 = vmatpush1.msra.mxu0 0.0
        %738 = vmatprep.subr.mxu0 0.0
        %739 = vmatpush1.msra.mxu0 0.0
        %740 = vmatprep.subr.mxu0 0.0
        %741 = vmatpush1.msra.mxu0 0.0
        %742 = vmatprep.subr.mxu0 0.0
        %743 = vmatpush1.msra.mxu0 0.0
        %744 = vmatprep.subr.mxu0 0.0
        %745 = vmatpush1.msra.mxu0 0.0
        %746 = vmatprep.subr.mxu0 0.0
        %747 = vmatpush1.msra.mxu0 0.0
        %748 = vmatprep.subr.mxu0 0.0
        %749 = vmatpush1.msra.mxu0 0.0
        %750 = vmatprep.subr.mxu0 0.0
        %751 = vmatpush1.msra.mxu0 0.0
        %752 = vmatprep.subr.mxu0 0.0
        %753 = vmatpush1.msra.mxu0 0.0
        %754 = vmatprep.subr.mxu0 0.0
        %755 = vmatpush1.msra.mxu0 0.0
        %756 = vmatprep.subr.mxu0 0.0
        %757 = vmatpush1.msra.mxu0 0.0
        %758 = vmatprep.mubr.f32.mxu0 0.0
        %759 = vmatmul.mubr.f32.gmra.mrb[0].mxu0 %v629
        %v760 = vpop.f32.mrb[0].mxu0
        %v761 = vadd.f32 0.0, %v760
        %v762 = vpop.f32.mrb[0].mxu0
        %763 = vmatprep.mubr.f32.mxu0 0.0
        %764 = vmatmul.mubr.f32.gmra.mrb[0].mxu0 %v630
        %v765 = vpop.f32.mrb[0].mxu0
        %v766 = vadd.f32 0.0, %v765
        %v767 = vpop.f32.mrb[0].mxu0
        %768 = vmatprep.mubr.f32.mxu0 0.0
        %769 = vmatmul.mubr.f32.gmra.mrb[0].mxu0 %v631
        %v770 = vpop.f32.mrb[0].mxu0
        %v771 = vadd.f32 0.0, %v770
        %v772 = vpop.f32.mrb[0].mxu0
        %773 = vmatprep.mubr.f32.mxu0 0.0
        %774 = vmatmul.mubr.f32.gmra.mrb[0].mxu0 %v632
        %v775 = vpop.f32.mrb[0].mxu0
        %v776 = vadd.f32 0.0, %v775
        %v777 = vpop.f32.mrb[0].mxu0
        %778 = vdwg.mxu0
        %779 = vmatprep.subr.mxu0 0.0
        %780 = vmatpush1.msra.mxu0 %v661
        %781 = vmatprep.subr.mxu0 0.0
        %782 = vmatpush1.msra.mxu0 %v662
        %783 = vmatprep.subr.mxu0 0.0
        %784 = vmatpush1.msra.mxu0 %v663
        %785 = vmatprep.subr.mxu0 0.0
        %786 = vmatpush1.msra.mxu0 %v664
        %787 = vmatprep.subr.mxu0 0.0
        %788 = vmatpush1.msra.mxu0 %v665
        %789 = vmatprep.subr.mxu0 0.0
        %790 = vmatpush1.msra.mxu0 %v666
        %791 = vmatprep.subr.mxu0 0.0
        %792 = vmatpush1.msra.mxu0 %v667
        %793 = vmatprep.subr.mxu0 0.0
        %794 = vmatpush1.msra.mxu0 %v668
        %795 = vmatprep.subr.mxu0 0.0
        %796 = vmatpush1.msra.mxu0 %v669
        %797 = vmatprep.subr.mxu0 0.0
        %798 = vmatpush1.msra.mxu0 %v670
        %799 = vmatprep.subr.mxu0 0.0
        %800 = vmatpush1.msra.mxu0 %v671
        %801 = vmatprep.subr.mxu0 0.0
        %802 = vmatpush1.msra.mxu0 %v672
        %803 = vmatprep.subr.mxu0 0.0
        %804 = vmatpush1.msra.mxu0 %v673
        %805 = vmatprep.subr.mxu0 0.0
        %806 = vmatpush1.msra.mxu0 %v674
        %807 = vmatprep.subr.mxu0 0.0
        %808 = vmatpush1.msra.mxu0 %v675
        %809 = vmatprep.subr.mxu0 0.0
        %810 = vmatpush1.msra.mxu0 %v676
        %811 = vmatprep.subr.mxu0 0.0
        %812 = vmatpush1.msra.mxu0 0.0
        %813 = vmatprep.subr.mxu0 0.0
        %814 = vmatpush1.msra.mxu0 0.0
        %815 = vmatprep.subr.mxu0 0.0
        %816 = vmatpush1.msra.mxu0 0.0
        %817 = vmatprep.subr.mxu0 0.0
        %818 = vmatpush1.msra.mxu0 0.0
        %819 = vmatprep.subr.mxu0 0.0
        %820 = vmatpush1.msra.mxu0 0.0
        %821 = vmatprep.subr.mxu0 0.0
        %822 = vmatpush1.msra.mxu0 0.0
        %823 = vmatprep.subr.mxu0 0.0
        %824 = vmatpush1.msra.mxu0 0.0
        %825 = vmatprep.subr.mxu0 0.0
        %826 = vmatpush1.msra.mxu0 0.0
        %827 = vmatprep.subr.mxu0 0.0
        %828 = vmatpush1.msra.mxu0 0.0
        %829 = vmatprep.subr.mxu0 0.0
        %830 = vmatpush1.msra.mxu0 0.0
        %831 = vmatprep.subr.mxu0 0.0
        %832 = vmatpush1.msra.mxu0 0.0
        %833 = vmatprep.subr.mxu0 0.0
        %834 = vmatpush1.msra.mxu0 0.0
        %835 = vmatprep.subr.mxu0 0.0
        %836 = vmatpush1.msra.mxu0 0.0
        %837 = vmatprep.subr.mxu0 0.0
        %838 = vmatpush1.msra.mxu0 0.0
        %839 = vmatprep.subr.mxu0 0.0
        %840 = vmatpush1.msra.mxu0 0.0
        %841 = vmatprep.subr.mxu0 0.0
        %842 = vmatpush1.msra.mxu0 0.0
        %843 = vmatprep.mubr.f32.mxu0 0.0
        %844 = vmatmul.mubr.f32.gmra.mrb[0].mxu0 %v647
        %v845 = vpop.f32.mrb[0].mxu0
        %v846 = vadd.f32 %v761, %v845
        %v847 = vpop.f32.mrb[0].mxu0
        %848 = vmatprep.mubr.f32.mxu0 0.0
        %849 = vmatmul.mubr.f32.gmra.mrb[0].mxu0 %v639
        %v850 = vpop.f32.mrb[0].mxu0
        %v851 = vadd.f32 %v766, %v850
        %v852 = vpop.f32.mrb[0].mxu0
        %853 = vmatprep.mubr.f32.mxu0 0.0
        %854 = vmatmul.mubr.f32.gmra.mrb[0].mxu0 %v648
        %v855 = vpop.f32.mrb[0].mxu0
        %v856 = vadd.f32 %v771, %v855
        %v857 = vpop.f32.mrb[0].mxu0
        %858 = vmatprep.mubr.f32.mxu0 0.0
        %859 = vmatmul.mubr.f32.gmra.mrb[0].mxu0 %v642
        %v860 = vpop.f32.mrb[0].mxu0
        %v861 = vadd.f32 %v776, %v860
        %v862 = vpop.f32.mrb[0].mxu0
        %863 = vdwg.mxu0
        %s864 = scalar_lea.vmem [#allocation7], 256
        %v865 = vld [vmem:[%s864] sm:$0xff]
        %v866 = vld [vmem:[%s864 + $0x8] sm:$0xff]
        %v867 = vld [vmem:[%s864 + $0x10] sm:$0xff]
        %v868 = vld [vmem:[%s864 + $0x18] sm:$0xff]
        %v869 = vld [vmem:[%s864 + $0x20] sm:$0xff]
        %v870 = vld [vmem:[%s864 + $0x28] sm:$0xff]
        %v871 = vld [vmem:[%s864 + $0x30] sm:$0xff]
        %v872 = vld [vmem:[%s864 + $0x38] sm:$0xff]
        %v873 = vld [vmem:[%s864 + $0x40] sm:$0xff]
        %v874 = vld [vmem:[%s864 + $0x48] sm:$0xff]
        %v875 = vld [vmem:[%s864 + $0x50] sm:$0xff]
        %v876 = vld [vmem:[%s864 + $0x58] sm:$0xff]
        %v877 = vld [vmem:[%s864 + $0x60] sm:$0xff]
        %v878 = vld [vmem:[%s864 + $0x68] sm:$0xff]
        %v879 = vld [vmem:[%s864 + $0x70] sm:$0xff]
        %v880 = vld [vmem:[%s864 + $0x78] sm:$0xff]
        %881 = vmatprep.subr.mxu0 0.0
        %882 = vmatpush1.msra.mxu0 %v865
        %883 = vmatprep.subr.mxu0 0.0
        %884 = vmatpush1.msra.mxu0 %v866
        %885 = vmatprep.subr.mxu0 0.0
        %886 = vmatpush1.msra.mxu0 %v867
        %887 = vmatprep.subr.mxu0 0.0
        %888 = vmatpush1.msra.mxu0 %v868
        %889 = vmatprep.subr.mxu0 0.0
        %890 = vmatpush1.msra.mxu0 %v869
        %891 = vmatprep.subr.mxu0 0.0
        %892 = vmatpush1.msra.mxu0 %v870
        %893 = vmatprep.subr.mxu0 0.0
        %894 = vmatpush1.msra.mxu0 %v871
        %895 = vmatprep.subr.mxu0 0.0
        %896 = vmatpush1.msra.mxu0 %v872
        %897 = vmatprep.subr.mxu0 0.0
        %898 = vmatpush1.msra.mxu0 %v873
        %899 = vmatprep.subr.mxu0 0.0
        %900 = vmatpush1.msra.mxu0 %v874
        %901 = vmatprep.subr.mxu0 0.0
        %902 = vmatpush1.msra.mxu0 %v875
        %903 = vmatprep.subr.mxu0 0.0
        %904 = vmatpush1.msra.mxu0 %v876
        %905 = vmatprep.subr.mxu0 0.0
        %906 = vmatpush1.msra.mxu0 %v877
        %907 = vmatprep.subr.mxu0 0.0
        %908 = vmatpush1.msra.mxu0 %v878
        %909 = vmatprep.subr.mxu0 0.0
        %910 = vmatpush1.msra.mxu0 %v879
        %911 = vmatprep.subr.mxu0 0.0
        %912 = vmatpush1.msra.mxu0 %v880
        %913 = vmatprep.subr.mxu0 0.0
        %914 = vmatpush1.msra.mxu0 0.0
        %915 = vmatprep.subr.mxu0 0.0
        %916 = vmatpush1.msra.mxu0 0.0
        %917 = vmatprep.subr.mxu0 0.0
        %918 = vmatpush1.msra.mxu0 0.0
        %919 = vmatprep.subr.mxu0 0.0
        %920 = vmatpush1.msra.mxu0 0.0
        %921 = vmatprep.subr.mxu0 0.0
        %922 = vmatpush1.msra.mxu0 0.0
        %923 = vmatprep.subr.mxu0 0.0
        %924 = vmatpush1.msra.mxu0 0.0
        %925 = vmatprep.subr.mxu0 0.0
        %926 = vmatpush1.msra.mxu0 0.0
        %927 = vmatprep.subr.mxu0 0.0
        %928 = vmatpush1.msra.mxu0 0.0
        %929 = vmatprep.subr.mxu0 0.0
        %930 = vmatpush1.msra.mxu0 0.0
        %931 = vmatprep.subr.mxu0 0.0
        %932 = vmatpush1.msra.mxu0 0.0
        %933 = vmatprep.subr.mxu0 0.0
        %934 = vmatpush1.msra.mxu0 0.0
        %935 = vmatprep.subr.mxu0 0.0
        %936 = vmatpush1.msra.mxu0 0.0
        %937 = vmatprep.subr.mxu0 0.0
        %938 = vmatpush1.msra.mxu0 0.0
        %939 = vmatprep.subr.mxu0 0.0
        %940 = vmatpush1.msra.mxu0 0.0
        %941 = vmatprep.subr.mxu0 0.0
        %942 = vmatpush1.msra.mxu0 0.0
        %943 = vmatprep.subr.mxu0 0.0
        %944 = vmatpush1.msra.mxu0 0.0
        %945 = vmatprep.mubr.f32.mxu0 0.0
        %946 = vmatmul.mubr.f32.gmra.mrb[0].mxu0 %v651
        %v947 = vpop.f32.mrb[0].mxu0
        %v948 = vadd.f32 0.0, %v947
        %v949 = vpop.f32.mrb[0].mxu0
        %950 = vmatprep.mubr.f32.mxu0 0.0
        %951 = vmatmul.mubr.f32.gmra.mrb[0].mxu0 %v659
        %v952 = vpop.f32.mrb[0].mxu0
        %v953 = vadd.f32 0.0, %v952
        %v954 = vpop.f32.mrb[0].mxu0
        %955 = vmatprep.mubr.f32.mxu0 0.0
        %956 = vmatmul.mubr.f32.gmra.mrb[0].mxu0 %v654
        %v957 = vpop.f32.mrb[0].mxu0
        %v958 = vadd.f32 0.0, %v957
        %v959 = vpop.f32.mrb[0].mxu0
        %960 = vmatprep.mubr.f32.mxu0 0.0
        %961 = vmatmul.mubr.f32.gmra.mrb[0].mxu0 %v660
        %v962 = vpop.f32.mrb[0].mxu0
        %v963 = vadd.f32 0.0, %v962
        %v964 = vpop.f32.mrb[0].mxu0
        %965 = vdwg.mxu0
        %v966 = vadd.f32 %v846, %v948
        %v967 = vadd.f32 %v851, %v953
        %v968 = vadd.f32 %v856, %v958
        %v969 = vadd.f32 %v861, %v963
        %v970 = vld [vmem:[%s4] sm:$0x1]
        %v972 = vlaneseq
        %v973 = vshrl.u32 %v972, 7
        %v974 = vsub.s32 0, %v973
        %v975 = vrot.slane %v970, %v974
        %v977 = vadd.f32 %v966, %v975
        %v978 = vadd.f32 %v967, %v975
        %v979 = vadd.f32 %v968, %v975
        %v980 = vadd.f32 %v969, %v975
        %v981 = vadd.f32 %v977, %v275
        %v982 = vadd.f32 %v978, %v276
        %v983 = vadd.f32 %v979, %v277
        %v984 = vadd.f32 %v980, %v278
        %v985 = vmax.f32 %v981, 0.0
        %v986 = vmax.f32 %v982, 0.0
        %v987 = vmax.f32 %v983, 0.0
        %v988 = vmax.f32 %v984, 0.0
        %989 = vst [vmem:[%s272] sm:$0xff] %v985
        %990 = vst [vmem:[%s272 + $0x8] sm:$0xff] %v986
        %991 = vst [vmem:[%s272 + $0x10] sm:$0xff] %v987
        %992 = vst [vmem:[%s272 + $0x18] sm:$0xff] %v988
        %s993 = sand.u32 %s141, 1
        %s994 = scalar_lea.sflag [#allocation4], %s993
        %s995 = sand.u32 %s141, 1
        %s996 = smul.addr %s995, 32
        %s997 = scalar_lea.vmem [#allocation8], %s996
        // Predicated region
        $region53: #{tpu_custom_call.1} parent=39 // pred_check
          %p998 = pneg %p151
        $region54: #{tpu_custom_call.1} parent=39 // pred_check_branch
          %1000 = sbr.rel (%p998) target = $region56
        $region55: #{tpu_custom_call.1} parent=39 // pred_region
          %s1001 = smul.u32 2, %s23
          %s1003 = ssub.s32 512, 512
          %1004 = vsyncadd %s994, %s1003
          %s1005 = smul.addr %s1001, 2
          %s1006 = smul.addr %s1005, 128
          %s1007 = scalar_lea.hbm %s5, %s1006
          %s1008 = sshll.u32 %s997, 4
          %s1009 = int_to_ptr.vmem [resolvable:$true] %s1008
          %1014 = dma.vmem_to_hbm [thread:$0]  %s1009, 512, %s1007, %s994, 128, 128, 8
        $region56: #{tpu_custom_call.1} parent=39 // pred_fallthru
          _
      $region40: #{tpu_custom_call.1} parent=5 // pred_fallthru
        _
      %p1015 = scmp.le.s32.totalorder 2, %s18
      // Predicated region
      $region57: #{tpu_custom_call.1} parent=5 // pred_check
        %p1016 = pneg %p1015
      $region58: #{tpu_custom_call.1} parent=5 // pred_check_branch
        %1018 = sbr.rel (%p1016) target = $region60
      $region59: #{tpu_custom_call.1} parent=5 // pred_region
        %s1019 = ssub.s32 %s18, 2
        // Predicated region
        $region61: #{tpu_custom_call.1} parent=59 // pred_check
          %p1020 = pneg %p157
        $region62: #{tpu_custom_call.1} parent=59 // pred_check_branch
          %1022 = sbr.rel (%p1020) target = $region64
        $region63: #{tpu_custom_call.1} parent=59 // pred_region
          %s1023 = sand.u32 %s142, 1
          %s1024 = scalar_lea.sflag [#allocation4], %s1023
          %s1025 = sand.u32 %s142, 1
          %s1026 = smul.addr %s1025, 32
          %s1027 = scalar_lea.vmem [#allocation8], %s1026
          %1028 = dma.done %s1024, 512
        $region64: #{tpu_custom_call.1} parent=59 // pred_fallthru
          _
      $region60: #{tpu_custom_call.1} parent=5 // pred_fallthru
        _
    $region6: #{tpu_custom_call.1} parent=1 // loop_footer
      %s22 = sadd.s32 1, %s18
    $region7: #{tpu_custom_call.1} parent=1 // loop_footer_branch
      %17 = sbr.rel target = $region3
    $region8: #{tpu_custom_call.1} parent=1 // loop_exit
      _
    %1029 = vsyncpa [#allocation3], 1
    %s1030 = scalar_lea.sflag [#allocation3], 1
    %1031 = vsyncpa %s1030, 1
    %1032 = vsyncpa [#allocation6], 1
    %1033 = vsyncpa [#allocation4], 1
    %s1034 = scalar_lea.sflag [#allocation4], 1
    %1035 = vsyncpa %s1034, 1

</llo_original>
